<compile_context>
chip_gen: v5e
topology: v5e:2x2
jax: 0.10.0
libtpu: 0.0.40
codegen_flags: <defaults>
</compile_context>

<pallas_src>
import jax
import jax.numpy as jnp
from jax.experimental import pallas as pl
from jax.experimental.pallas import tpu as pltpu

D_IN = 512
D_HID = 128
NUM_CLASSES = 2
TB_MAX = 2048            # batch-tile rows (overhead-amortized, keeps grid>=2 on v7x for B>=4096)


def _round_up(n, m):
    return ((n + m - 1) // m) * m


def _discriminator_kernel(x_ref, w1_ref, b1_ref, w2_ref, b2_ref, o_ref):
    # ReLU directly on the loaded f32 tile (exact in any dtype), then a single
    # cast to bf16 to feed the MXU.  No f32<->bf16 round trip materialized.
    x = jnp.maximum(x_ref[...], 0.0)

    # Linear(512 -> 128): bf16 MXU matmul, f32 accumulation; bias + ReLU in f32.
    h = jnp.dot(x.astype(jnp.bfloat16), w1_ref[...],
                preferred_element_type=jnp.float32)
    h = jnp.maximum(h + b1_ref[...], 0.0)

    # Linear(128 -> num_classes): tiny, kept in f32 for accuracy (MXU is slack).
    out = jnp.dot(h, w2_ref[...], preferred_element_type=jnp.float32) + b2_ref[...]
    o_ref[...] = out.astype(o_ref.dtype)


def prepare_params(w1, b1, w2, b2):
    """One-time weight prep (keeps per-call forward path free of cast/reshape ops).

    Weights are stored [in, out] (transposed vs. PyTorch's [out, in]).
    """
    return (
        w1.astype(jnp.bfloat16),                      # [512, 128] bf16 (resident in VMEM)
        b1.reshape(1, D_HID).astype(jnp.float32),     # [1, 128]
        w2.astype(jnp.float32),                       # [128, num_classes]
        b2.reshape(1, -1).astype(jnp.float32),        # [1, num_classes]
    )


@jax.jit
def discriminator_forward(x, w1_bf16, b1_2d, w2_f32, b2_2d):
    """x: [B, 512] float32 -> [B, num_classes] float32."""
    B = x.shape[0]
    ncls = w2_f32.shape[1]

    # Batch tile: multiple of 8 (sublane), capped at TB_MAX.  No jnp.pad pass —
    # a ragged last block is handled by the pipeline (rows are independent).
    tb = min(TB_MAX, _round_up(B, 8))
    grid = (pl.cdiv(B, tb),)

    return pl.pallas_call(
        _discriminator_kernel,
        out_shape=jax.ShapeDtypeStruct((B, ncls), jnp.float32),
        grid=grid,
        in_specs=[
            pl.BlockSpec((tb, D_IN), lambda i: (i, 0)),       # x tile (double-buffered)
            pl.BlockSpec((D_IN, D_HID), lambda i: (0, 0)),    # w1 (resident)
            pl.BlockSpec((1, D_HID), lambda i: (0, 0)),       # b1 (resident)
            pl.BlockSpec((D_HID, ncls), lambda i: (0, 0)),    # w2 (resident)
            pl.BlockSpec((1, ncls), lambda i: (0, 0)),        # b2 (resident)
        ],
        out_specs=pl.BlockSpec((tb, ncls), lambda i: (i, 0)), # narrow lane output
        compiler_params=pltpu.CompilerParams(
            dimension_semantics=("parallel",),                # megacore split on v7x
            vmem_limit_bytes=48 << 20,
        ),
    )(x, w1_bf16, b1_2d, w2_f32, b2_2d)


def init_params(key):
    """Deterministic synthetic init mimicking PyTorch Linear default (uniform)."""
    k1, k2, k3, k4 = jax.random.split(key, 4)
    bound1 = 1.0 / jnp.sqrt(D_IN)
    bound2 = 1.0 / jnp.sqrt(D_HID)
    # Stored as [in, out] (transposed relative to torch's [out, in]).
    w1 = jax.random.uniform(k1, (D_IN, D_HID), jnp.float32, -bound1, bound1)
    b1 = jax.random.uniform(k2, (D_HID,), jnp.float32, -bound1, bound1)
    w2 = jax.random.uniform(k3, (D_HID, NUM_CLASSES), jnp.float32, -bound2, bound2)
    b2 = jax.random.uniform(k4, (NUM_CLASSES,), jnp.float32, -bound2, bound2)
    return w1, b1, w2, b2


def reference_forward(x, w1, b1, w2, b2):
    h = jnp.maximum(x, 0.0)
    h = jnp.maximum(h @ w1 + b1, 0.0)
    return h @ w2 + b2


if __name__ == "__main__":
    key = jax.random.PRNGKey(0)
    kx, kp = jax.random.split(key)

    B = 2
    x = jax.random.normal(kx, (B, D_IN), jnp.float32)
    w1, b1, w2, b2 = init_params(kp)

    params = prepare_params(w1, b1, w2, b2)
    out = discriminator_forward(x, *params)
    out = jax.block_until_ready(out)

    ref = reference_forward(x, w1, b1, w2, b2)
    assert out.shape == (B, NUM_CLASSES)
    # bf16 layer-1 matmul inputs (f32 accumulation) -> loosened tolerance vs f32 ref.
    assert jnp.allclose(out, ref, atol=3e-2, rtol=3e-2), (out, ref)

    print("KERNEL_OK")
</pallas_src>

<mosaic_0001>
module attributes {stable_mosaic.version = 11 : i64} {
  func.func @_discriminator_kernel(%arg0: i32, %arg1: memref<8x512xf32, #tpu.memory_space<vmem>>, %arg2: memref<512x128xbf16, #tpu.memory_space<vmem>>, %arg3: memref<1x128xf32, #tpu.memory_space<vmem>>, %arg4: memref<128x2xf32, #tpu.memory_space<vmem>>, %arg5: memref<1x2xf32, #tpu.memory_space<vmem>>, %arg6: memref<8x2xf32, #tpu.memory_space<vmem>>) attributes {dimension_semantics = [#tpu.dimension_semantics<parallel>], iteration_bounds = array<i64: 1>, scalar_prefetch = 0 : i64, scratch_operands = 0 : i64, tpu.core_type = #tpu.core_type<tc>, window_params = [{transform_indices = @transform_0, window_bounds = array<i64: 8, 512>}, {pipeline_mode = #tpu.pipeline_mode<synchronous>, transform_indices = @transform_1, window_bounds = array<i64: 512, 128>}, {pipeline_mode = #tpu.pipeline_mode<synchronous>, transform_indices = @transform_2, window_bounds = array<i64: 1, 128>}, {pipeline_mode = #tpu.pipeline_mode<synchronous>, transform_indices = @transform_3, window_bounds = array<i64: 128, 2>}, {pipeline_mode = #tpu.pipeline_mode<synchronous>, transform_indices = @transform_4, window_bounds = array<i64: 1, 2>}, {transform_indices = @transform_5, window_bounds = array<i64: 8, 2>}]} {
    %c0 = arith.constant 0 : index
    %c0_0 = arith.constant 0 : index
    %0 = vector.load %arg1[%c0, %c0_0] : memref<8x512xf32, #tpu.memory_space<vmem>>, vector<8x512xf32>
    %cst = arith.constant 0.000000e+00 : f32
    %1 = vector.broadcast %cst : f32 to vector<8x512xf32>
    %2 = arith.maximumf %0, %1 : vector<8x512xf32>
    %3 = arith.truncf %2 : vector<8x512xf32> to vector<8x512xbf16>
    %c0_1 = arith.constant 0 : index
    %c0_2 = arith.constant 0 : index
    %4 = vector.load %arg2[%c0_1, %c0_2] : memref<512x128xbf16, #tpu.memory_space<vmem>>, vector<512x128xbf16>
    %cst_3 = arith.constant dense<0.000000e+00> : vector<8x128xf32>
    %5 = tpu.matmul %3, %4, %cst_3 {dimension_numbers = #tpu.dot_dimension_numbers<[1], [0], [0], [1], [0, 0, 1, 1], [], []>} : vector<8x512xbf16>, vector<512x128xbf16>, vector<8x128xf32> -> vector<8x128xf32>
    %c0_4 = arith.constant 0 : index
    %c0_5 = arith.constant 0 : index
    %6 = vector.load %arg3[%c0_4, %c0_5] : memref<1x128xf32, #tpu.memory_space<vmem>>, vector<1x128xf32>
    %7 = vector.broadcast %6 : vector<1x128xf32> to vector<8x128xf32>
    %8 = arith.addf %5, %7 : vector<8x128xf32>
    %cst_6 = arith.constant 0.000000e+00 : f32
    %9 = vector.broadcast %cst_6 : f32 to vector<8x128xf32>
    %10 = arith.maximumf %8, %9 : vector<8x128xf32>
    %c0_7 = arith.constant 0 : index
    %c0_8 = arith.constant 0 : index
    %11 = vector.load %arg4[%c0_7, %c0_8] : memref<128x2xf32, #tpu.memory_space<vmem>>, vector<128x2xf32>
    %cst_9 = arith.constant dense<0.000000e+00> : vector<8x2xf32>
    %12 = tpu.matmul %10, %11, %cst_9 {dimension_numbers = #tpu.dot_dimension_numbers<[1], [0], [0], [1], [0, 0, 1, 1], [], []>} : vector<8x128xf32>, vector<128x2xf32>, vector<8x2xf32> -> vector<8x2xf32>
    %c0_10 = arith.constant 0 : index
    %c0_11 = arith.constant 0 : index
    %13 = vector.load %arg5[%c0_10, %c0_11] : memref<1x2xf32, #tpu.memory_space<vmem>>, vector<1x2xf32>
    %14 = vector.broadcast %13 : vector<1x2xf32> to vector<8x2xf32>
    %15 = arith.addf %12, %14 : vector<8x2xf32>
    %c0_12 = arith.constant 0 : index
    %c0_13 = arith.constant 0 : index
    %16 = vector.load %arg6[%c0_12, %c0_13] : memref<8x2xf32, #tpu.memory_space<vmem>>, vector<8x2xf32>
    tpu.vector_store %arg6[%c0_12, %c0_13], %15 {strides = array<i32>} : memref<8x2xf32, #tpu.memory_space<vmem>>, vector<8x2xf32>,
    return
  }
  func.func @transform_0(%arg0: i32) -> (i32, i32) {
    %c0_i32 = arith.constant 0 : i32
    %c0_i32_0 = arith.constant 0 : i32
    return %arg0, %c0_i32 : i32, i32
  }
  func.func @transform_1(%arg0: i32) -> (i32, i32) {
    %c0_i32 = arith.constant 0 : i32
    %c0_i32_0 = arith.constant 0 : i32
    %c0_i32_1 = arith.constant 0 : i32
    return %c0_i32, %c0_i32_0 : i32, i32
  }
  func.func @transform_2(%arg0: i32) -> (i32, i32) {
    %c0_i32 = arith.constant 0 : i32
    %c0_i32_0 = arith.constant 0 : i32
    %c0_i32_1 = arith.constant 0 : i32
    return %c0_i32, %c0_i32_0 : i32, i32
  }
  func.func @transform_3(%arg0: i32) -> (i32, i32) {
    %c0_i32 = arith.constant 0 : i32
    %c0_i32_0 = arith.constant 0 : i32
    %c0_i32_1 = arith.constant 0 : i32
    return %c0_i32, %c0_i32_0 : i32, i32
  }
  func.func @transform_4(%arg0: i32) -> (i32, i32) {
    %c0_i32 = arith.constant 0 : i32
    %c0_i32_0 = arith.constant 0 : i32
    %c0_i32_1 = arith.constant 0 : i32
    return %c0_i32, %c0_i32_0 : i32, i32
  }
  func.func @transform_5(%arg0: i32) -> (i32, i32) {
    %c0_i32 = arith.constant 0 : i32
    %c0_i32_0 = arith.constant 0 : i32
    return %arg0, %c0_i32 : i32, i32
  }
}

</mosaic_0001>

<llo_original>
// kernel: discriminator_forward.1
$region0: #{discriminator_forward.1}
  #allocation0 [shape = 'u32[]', space=smem, size = 0x4, offset = 0x4, fixed_abs, tag = 'smem constant byte address 0x4 - core index']
  #allocation1 [shape = 'u32[72,128]{1,0:T(1,128)}', space=vmem, size = 0x9000, scoped, tag = 'internal scratch']
  %s0 = inlined_call_operand.vmem [shape: f32[2,512], index: 0, kind: input, shape index: {}]
  %s1 = inlined_call_operand.hbm [shape: bf16[512,128], index: 1, kind: input, shape index: {}]
  %s2 = inlined_call_operand.vmem [shape: f32[1,128], index: 2, kind: input, shape index: {}]
  %s3 = inlined_call_operand.vmem [shape: f32[128,2], index: 3, kind: input, shape index: {}]
  %s4 = inlined_call_operand.vmem [shape: f32[1,2], index: 4, kind: input, shape index: {}]
  %s5 = inlined_call_operand.hbm [shape: f32[2,2], index: 5, kind: output, shape index: {}]
  %s6 = sld [smem:[#allocation0]]
  $region34: #{discriminator_forward.1} parent=0
    _
  %s8 = ssub.s32 1, %s6
  %s9 = scalar_select 0, %s8, %s6
  $region1: #{discriminator_forward.1} parent=0
    #allocation2 [shape = 'u8[131072]{0}', space=vmem, size = 0x20000, scoped, tag = 'input window, operand 1, single buffered']
    #allocation3 [shape = 's32[1]{0}', space=sflag, size = 0x4, scoped, tag = 'scoped memory for discriminator_forward.1']
    #allocation4 [shape = 's32[1]{0}', space=sflag, size = 0x4, scoped, tag = 'scoped memory for discriminator_forward.1']
    #allocation5 [shape = 'u8[4096]{0}', space=vmem, size = 0x1000, scoped, tag = 'output window, operand 0, single buffered']
    %10 = vsyncpa [#allocation3], 0
    %11 = vsyncpa [#allocation4], 0
    // Predicated region
    $region2: #{discriminator_forward.1} parent=1 // pred_check
      _
    $region3: #{discriminator_forward.1} parent=1 // pred_check_branch
      %13 = sbr.rel (0) target = $region5
    $region4: #{discriminator_forward.1} parent=1 // pred_region
      _
    $region5: #{discriminator_forward.1} parent=1 // pred_fallthru
      _
    // Predicated region
    $region6: #{discriminator_forward.1} parent=1 // pred_check
      _
    $region7: #{discriminator_forward.1} parent=1 // pred_check_branch
      %15 = sbr.rel (0) target = $region9
    $region8: #{discriminator_forward.1} parent=1 // pred_region
      %17 = vsyncadd [#allocation3], 0
      %s18 = sshll.u32 %s1, 4
      %s19 = int_to_ptr.hbm [resolvable:$true] %s18
      %s20 = sshll.u32 [#allocation2], 4
      %s21 = int_to_ptr.vmem [resolvable:$true] %s20
      %26 = dma.hbm_to_vmem [thread:$0]  %s19, 4096, %s21, [#allocation3], 64, 64, 4
    $region9: #{discriminator_forward.1} parent=1 // pred_fallthru
      _
    // Predicated region
    $region10: #{discriminator_forward.1} parent=1 // pred_check
      _
    $region11: #{discriminator_forward.1} parent=1 // pred_check_branch
      %28 = sbr.rel (0) target = $region13
    $region12: #{discriminator_forward.1} parent=1 // pred_region
      _
    $region13: #{discriminator_forward.1} parent=1 // pred_fallthru
      _
    // Predicated region
    $region14: #{discriminator_forward.1} parent=1 // pred_check
      _
    $region15: #{discriminator_forward.1} parent=1 // pred_check_branch
      %30 = sbr.rel (0) target = $region17
    $region16: #{discriminator_forward.1} parent=1 // pred_region
      _
    $region17: #{discriminator_forward.1} parent=1 // pred_fallthru
      _
    // Predicated region
    $region18: #{discriminator_forward.1} parent=1 // pred_check
      _
    $region19: #{discriminator_forward.1} parent=1 // pred_check_branch
      %32 = sbr.rel (0) target = $region21
    $region20: #{discriminator_forward.1} parent=1 // pred_region
      _
    $region21: #{discriminator_forward.1} parent=1 // pred_fallthru
      _
    // Predicated region
    $region22: #{discriminator_forward.1} parent=1 // pred_check
      _
    $region23: #{discriminator_forward.1} parent=1 // pred_check_branch
      %34 = sbr.rel (0) target = $region25
    $region24: #{discriminator_forward.1} parent=1 // pred_region
      %36 = dma.done [#allocation3], 4096
    $region25: #{discriminator_forward.1} parent=1 // pred_fallthru
      _
    %v37 = vld [vmem:[%s0] sm:$0xff]
    %v38 = vld [vmem:[%s0 + $0x8] sm:$0xff]
    %v39 = vld [vmem:[%s0 + $0x10] sm:$0xff]
    %v40 = vld [vmem:[%s0 + $0x18] sm:$0xff]
    %v41 = vmax.f32 %v37, 0.0
    %v42 = vmax.f32 %v38, 0.0
    %v43 = vmax.f32 %v39, 0.0
    %v44 = vmax.f32 %v40, 0.0
    %49 = vst [vmem:[#allocation1] ss:$4 sm:$0xff] %v41
    %s50 = scalar_lea.vmem [#allocation1], 1
    %51 = vst [vmem:[%s50] ss:$4 sm:$0xff] %v42
    %s52 = scalar_lea.vmem [#allocation1], 2
    %53 = vst [vmem:[%s52] ss:$4 sm:$0xff] %v43
    %s54 = scalar_lea.vmem [#allocation1], 3
    %55 = vst [vmem:[%s54] ss:$4 sm:$0xff] %v44
    %v56 = vld.sshfl [vmem:[#allocation1] sm:$0xff pattern:$0x73625140]
    %v57 = vld.sshfl [vmem:[#allocation1 + $0x8] sm:$0xff pattern:$0x73625140]
    %v58 = vld.sshfl [vmem:[#allocation1 + $0x10] sm:$0xff pattern:$0x73625140]
    %v59 = vld.sshfl [vmem:[#allocation1 + $0x18] sm:$0xff pattern:$0x73625140]
    %v64 = vpack.c.bf16 %v56, %v56
    %v65 = vpack.c.bf16 %v57, %v57
    %v66 = vpack.c.bf16 %v58, %v58
    %v67 = vpack.c.bf16 %v59, %v59
    %v68 = vld [vmem:[#allocation2] sm:$0xf]
    %v69 = vld [vmem:[#allocation2 + $0x4] sm:$0xf]
    %v70 = vld [vmem:[#allocation2 + $0x8] sm:$0xf]
    %v71 = vld [vmem:[#allocation2 + $0xc] sm:$0xf]
    %v72 = vld [vmem:[#allocation2 + $0x10] sm:$0xf]
    %v73 = vld [vmem:[#allocation2 + $0x14] sm:$0xf]
    %v74 = vld [vmem:[#allocation2 + $0x18] sm:$0xf]
    %v75 = vld [vmem:[#allocation2 + $0x1c] sm:$0xf]
    %v76 = vld [vmem:[#allocation2 + $0x20] sm:$0xf]
    %v77 = vld [vmem:[#allocation2 + $0x24] sm:$0xf]
    %v78 = vld [vmem:[#allocation2 + $0x28] sm:$0xf]
    %v79 = vld [vmem:[#allocation2 + $0x2c] sm:$0xf]
    %v80 = vld [vmem:[#allocation2 + $0x30] sm:$0xf]
    %v81 = vld [vmem:[#allocation2 + $0x34] sm:$0xf]
    %v82 = vld [vmem:[#allocation2 + $0x38] sm:$0xf]
    %v83 = vld [vmem:[#allocation2 + $0x3c] sm:$0xf]
    %v84 = vld [vmem:[#allocation2 + $0x40] sm:$0xf]
    %v85 = vld [vmem:[#allocation2 + $0x44] sm:$0xf]
    %v86 = vld [vmem:[#allocation2 + $0x48] sm:$0xf]
    %v87 = vld [vmem:[#allocation2 + $0x4c] sm:$0xf]
    %v88 = vld [vmem:[#allocation2 + $0x50] sm:$0xf]
    %v89 = vld [vmem:[#allocation2 + $0x54] sm:$0xf]
    %v90 = vld [vmem:[#allocation2 + $0x58] sm:$0xf]
    %v91 = vld [vmem:[#allocation2 + $0x5c] sm:$0xf]
    %v92 = vld [vmem:[#allocation2 + $0x60] sm:$0xf]
    %v93 = vld [vmem:[#allocation2 + $0x64] sm:$0xf]
    %v94 = vld [vmem:[#allocation2 + $0x68] sm:$0xf]
    %v95 = vld [vmem:[#allocation2 + $0x6c] sm:$0xf]
    %v96 = vld [vmem:[#allocation2 + $0x70] sm:$0xf]
    %v97 = vld [vmem:[#allocation2 + $0x74] sm:$0xf]
    %v98 = vld [vmem:[#allocation2 + $0x78] sm:$0xf]
    %v99 = vld [vmem:[#allocation2 + $0x7c] sm:$0xf]
    %v100 = vld [vmem:[#allocation2 + $0x80] sm:$0xf]
    %v101 = vld [vmem:[#allocation2 + $0x84] sm:$0xf]
    %v102 = vld [vmem:[#allocation2 + $0x88] sm:$0xf]
    %v103 = vld [vmem:[#allocation2 + $0x8c] sm:$0xf]
    %v104 = vld [vmem:[#allocation2 + $0x90] sm:$0xf]
    %v105 = vld [vmem:[#allocation2 + $0x94] sm:$0xf]
    %v106 = vld [vmem:[#allocation2 + $0x98] sm:$0xf]
    %v107 = vld [vmem:[#allocation2 + $0x9c] sm:$0xf]
    %v108 = vld [vmem:[#allocation2 + $0xa0] sm:$0xf]
    %v109 = vld [vmem:[#allocation2 + $0xa4] sm:$0xf]
    %v110 = vld [vmem:[#allocation2 + $0xa8] sm:$0xf]
    %v111 = vld [vmem:[#allocation2 + $0xac] sm:$0xf]
    %v112 = vld [vmem:[#allocation2 + $0xb0] sm:$0xf]
    %v113 = vld [vmem:[#allocation2 + $0xb4] sm:$0xf]
    %v114 = vld [vmem:[#allocation2 + $0xb8] sm:$0xf]
    %v115 = vld [vmem:[#allocation2 + $0xbc] sm:$0xf]
    %v116 = vld [vmem:[#allocation2 + $0xc0] sm:$0xf]
    %v117 = vld [vmem:[#allocation2 + $0xc4] sm:$0xf]
    %v118 = vld [vmem:[#allocation2 + $0xc8] sm:$0xf]
    %v119 = vld [vmem:[#allocation2 + $0xcc] sm:$0xf]
    %v120 = vld [vmem:[#allocation2 + $0xd0] sm:$0xf]
    %v121 = vld [vmem:[#allocation2 + $0xd4] sm:$0xf]
    %v122 = vld [vmem:[#allocation2 + $0xd8] sm:$0xf]
    %v123 = vld [vmem:[#allocation2 + $0xdc] sm:$0xf]
    %v124 = vld [vmem:[#allocation2 + $0xe0] sm:$0xf]
    %v125 = vld [vmem:[#allocation2 + $0xe4] sm:$0xf]
    %v126 = vld [vmem:[#allocation2 + $0xe8] sm:$0xf]
    %v127 = vld [vmem:[#allocation2 + $0xec] sm:$0xf]
    %v128 = vld [vmem:[#allocation2 + $0xf0] sm:$0xf]
    %v129 = vld [vmem:[#allocation2 + $0xf4] sm:$0xf]
    %v130 = vld [vmem:[#allocation2 + $0xf8] sm:$0xf]
    %v131 = vld [vmem:[#allocation2 + $0xfc] sm:$0xf]
    %v132 = vld [vmem:[%s2] sm:$0x1]
    %v134 = vperm.slane %v132, 0
    %v200 = vunpack.c.l.b16 %v68
    %v201 = vunpack.c.l.b16 %v69
    %v202 = vunpack.c.l.b16 %v70
    %v203 = vunpack.c.l.b16 %v71
    %v204 = vunpack.c.l.b16 %v72
    %v205 = vunpack.c.l.b16 %v73
    %v206 = vunpack.c.l.b16 %v74
    %v207 = vunpack.c.l.b16 %v75
    %v208 = vunpack.c.l.b16 %v76
    %v209 = vunpack.c.l.b16 %v77
    %v210 = vunpack.c.l.b16 %v78
    %v211 = vunpack.c.l.b16 %v79
    %v212 = vunpack.c.l.b16 %v80
    %v213 = vunpack.c.l.b16 %v81
    %v214 = vunpack.c.l.b16 %v82
    %v215 = vunpack.c.l.b16 %v83
    %v216 = vunpack.c.l.b16 %v84
    %v217 = vunpack.c.l.b16 %v85
    %v218 = vunpack.c.l.b16 %v86
    %v219 = vunpack.c.l.b16 %v87
    %v220 = vunpack.c.l.b16 %v88
    %v221 = vunpack.c.l.b16 %v89
    %v222 = vunpack.c.l.b16 %v90
    %v223 = vunpack.c.l.b16 %v91
    %v224 = vunpack.c.l.b16 %v92
    %v225 = vunpack.c.l.b16 %v93
    %v226 = vunpack.c.l.b16 %v94
    %v227 = vunpack.c.l.b16 %v95
    %v228 = vunpack.c.l.b16 %v96
    %v229 = vunpack.c.l.b16 %v97
    %v230 = vunpack.c.l.b16 %v98
    %v231 = vunpack.c.l.b16 %v99
    %v232 = vunpack.c.l.b16 %v100
    %v233 = vunpack.c.l.b16 %v101
    %v234 = vunpack.c.l.b16 %v102
    %v235 = vunpack.c.l.b16 %v103
    %v236 = vunpack.c.l.b16 %v104
    %v237 = vunpack.c.l.b16 %v105
    %v238 = vunpack.c.l.b16 %v106
    %v239 = vunpack.c.l.b16 %v107
    %v240 = vunpack.c.l.b16 %v108
    %v241 = vunpack.c.l.b16 %v109
    %v242 = vunpack.c.l.b16 %v110
    %v243 = vunpack.c.l.b16 %v111
    %v244 = vunpack.c.l.b16 %v112
    %v245 = vunpack.c.l.b16 %v113
    %v246 = vunpack.c.l.b16 %v114
    %v247 = vunpack.c.l.b16 %v115
    %v248 = vunpack.c.l.b16 %v116
    %v249 = vunpack.c.l.b16 %v117
    %v250 = vunpack.c.l.b16 %v118
    %v251 = vunpack.c.l.b16 %v119
    %v252 = vunpack.c.l.b16 %v120
    %v253 = vunpack.c.l.b16 %v121
    %v254 = vunpack.c.l.b16 %v122
    %v255 = vunpack.c.l.b16 %v123
    %v256 = vunpack.c.l.b16 %v124
    %v257 = vunpack.c.l.b16 %v125
    %v258 = vunpack.c.l.b16 %v126
    %v259 = vunpack.c.l.b16 %v127
    %v260 = vunpack.c.l.b16 %v128
    %v261 = vunpack.c.l.b16 %v129
    %v262 = vunpack.c.l.b16 %v130
    %v263 = vunpack.c.l.b16 %v131
    %v264 = vpack.c.b16 %v201, %v200
    %v265 = vpack.c.b16 %v203, %v202
    %v266 = vpack.c.b16 %v205, %v204
    %v267 = vpack.c.b16 %v207, %v206
    %v268 = vpack.c.b16 %v209, %v208
    %v269 = vpack.c.b16 %v211, %v210
    %v270 = vpack.c.b16 %v213, %v212
    %v271 = vpack.c.b16 %v215, %v214
    %v272 = vpack.c.b16 %v217, %v216
    %v273 = vpack.c.b16 %v219, %v218
    %v274 = vpack.c.b16 %v221, %v220
    %v275 = vpack.c.b16 %v223, %v222
    %v276 = vpack.c.b16 %v225, %v224
    %v277 = vpack.c.b16 %v227, %v226
    %v278 = vpack.c.b16 %v229, %v228
    %v279 = vpack.c.b16 %v231, %v230
    %v280 = vpack.c.b16 %v233, %v232
    %v281 = vpack.c.b16 %v235, %v234
    %v282 = vpack.c.b16 %v237, %v236
    %v283 = vpack.c.b16 %v239, %v238
    %v284 = vpack.c.b16 %v241, %v240
    %v285 = vpack.c.b16 %v243, %v242
    %v286 = vpack.c.b16 %v245, %v244
    %v287 = vpack.c.b16 %v247, %v246
    %v288 = vpack.c.b16 %v249, %v248
    %v289 = vpack.c.b16 %v251, %v250
    %v290 = vpack.c.b16 %v253, %v252
    %v291 = vpack.c.b16 %v255, %v254
    %v292 = vpack.c.b16 %v257, %v256
    %v293 = vpack.c.b16 %v259, %v258
    %v294 = vpack.c.b16 %v261, %v260
    %v295 = vpack.c.b16 %v263, %v262
    %328 = vmatpush.bf16.msra.mxu0 %v271
    %329 = vmatpush.bf16.msra.mxu0 %v270
    %330 = vmatpush.bf16.msra.mxu0 %v269
    %331 = vmatpush.bf16.msra.mxu0 %v268
    %332 = vmatpush.bf16.msra.mxu0 %v267
    %333 = vmatpush.bf16.msra.mxu0 %v266
    %334 = vmatpush.bf16.msra.mxu0 %v265
    %335 = vmatpush.bf16.msra.mxu0 %v264
    %336 = vmatmul.bf16.gmra.mxu0 %v64
    %v337 = vpop.f32.mrf.mxu0
    %v338 = vadd.f32 %v134, %v337
    %v339 = vpop.f32.mrf.mxu0
    %340 = vdwg.mxu0
    %341 = vmatpush.bf16.msra.mxu0 %v279
    %342 = vmatpush.bf16.msra.mxu0 %v278
    %343 = vmatpush.bf16.msra.mxu0 %v277
    %344 = vmatpush.bf16.msra.mxu0 %v276
    %345 = vmatpush.bf16.msra.mxu0 %v275
    %346 = vmatpush.bf16.msra.mxu0 %v274
    %347 = vmatpush.bf16.msra.mxu0 %v273
    %348 = vmatpush.bf16.msra.mxu0 %v272
    %349 = vmatmul.bf16.gmra.mxu0 %v65
    %v350 = vpop.f32.mrf.mxu0
    %v351 = vadd.f32 %v338, %v350
    %v352 = vpop.f32.mrf.mxu0
    %353 = vdwg.mxu0
    %354 = vmatpush.bf16.msra.mxu0 %v287
    %355 = vmatpush.bf16.msra.mxu0 %v286
    %356 = vmatpush.bf16.msra.mxu0 %v285
    %357 = vmatpush.bf16.msra.mxu0 %v284
    %358 = vmatpush.bf16.msra.mxu0 %v283
    %359 = vmatpush.bf16.msra.mxu0 %v282
    %360 = vmatpush.bf16.msra.mxu0 %v281
    %361 = vmatpush.bf16.msra.mxu0 %v280
    %362 = vmatmul.bf16.gmra.mxu0 %v66
    %v363 = vpop.f32.mrf.mxu0
    %v364 = vadd.f32 %v351, %v363
    %v365 = vpop.f32.mrf.mxu0
    %366 = vdwg.mxu0
    %367 = vmatpush.bf16.msra.mxu0 %v295
    %368 = vmatpush.bf16.msra.mxu0 %v294
    %369 = vmatpush.bf16.msra.mxu0 %v293
    %370 = vmatpush.bf16.msra.mxu0 %v292
    %371 = vmatpush.bf16.msra.mxu0 %v291
    %372 = vmatpush.bf16.msra.mxu0 %v290
    %373 = vmatpush.bf16.msra.mxu0 %v289
    %374 = vmatpush.bf16.msra.mxu0 %v288
    %375 = vmatmul.bf16.gmra.mxu0 %v67
    %v376 = vpop.f32.mrf.mxu0
    %v377 = vadd.f32 %v364, %v376
    %v378 = vpop.f32.mrf.mxu0
    %379 = vdwg.mxu0
    %v380 = vmax.f32 %v377, 0.0
    %v381 = vld [vmem:[%s3] sm:$0xff]
    %v382 = vld [vmem:[%s3 + $0x8] sm:$0xff]
    %v383 = vld [vmem:[%s3 + $0x10] sm:$0xff]
    %v384 = vld [vmem:[%s3 + $0x18] sm:$0xff]
    %v385 = vld [vmem:[%s3 + $0x20] sm:$0xff]
    %v386 = vld [vmem:[%s3 + $0x28] sm:$0xff]
    %v387 = vld [vmem:[%s3 + $0x30] sm:$0xff]
    %v388 = vld [vmem:[%s3 + $0x38] sm:$0xff]
    %v389 = vld [vmem:[%s3 + $0x40] sm:$0xff]
    %v390 = vld [vmem:[%s3 + $0x48] sm:$0xff]
    %v391 = vld [vmem:[%s3 + $0x50] sm:$0xff]
    %v392 = vld [vmem:[%s3 + $0x58] sm:$0xff]
    %v393 = vld [vmem:[%s3 + $0x60] sm:$0xff]
    %v394 = vld [vmem:[%s3 + $0x68] sm:$0xff]
    %v395 = vld [vmem:[%s3 + $0x70] sm:$0xff]
    %v396 = vld [vmem:[%s3 + $0x78] sm:$0xff]
    %v397 = vld [vmem:[%s4] sm:$0x1]
    %v399 = vperm.slane %v397, 0
    %401 = vmatpush.msra.mxu0 %v396
    %402 = vmatpush.msra.mxu0 %v395
    %403 = vmatpush.msra.mxu0 %v394
    %404 = vmatpush.msra.mxu0 %v393
    %405 = vmatpush.msra.mxu0 %v392
    %406 = vmatpush.msra.mxu0 %v391
    %407 = vmatpush.msra.mxu0 %v390
    %408 = vmatpush.msra.mxu0 %v389
    %409 = vmatpush.msra.mxu0 %v388
    %410 = vmatpush.msra.mxu0 %v387
    %411 = vmatpush.msra.mxu0 %v386
    %412 = vmatpush.msra.mxu0 %v385
    %413 = vmatpush.msra.mxu0 %v384
    %414 = vmatpush.msra.mxu0 %v383
    %415 = vmatpush.msra.mxu0 %v382
    %416 = vmatpush.msra.mxu0 %v381
    %417 = vmatmul.f32.gmra.mxu0 %v380
    %v418 = vpop.f32.mrf.mxu0
    %v419 = vadd.f32 %v399, %v418
    %420 = vdwg.mxu0
    %vm421 = vcmask 15360
    %422 = vst.msk [vmem:[#allocation5] sm:$0xff] %vm421, %v419
    // Predicated region
    $region26: #{discriminator_forward.1} parent=1 // pred_check
      _
    $region27: #{discriminator_forward.1} parent=1 // pred_check_branch
      %424 = sbr.rel (0) target = $region29
    $region28: #{discriminator_forward.1} parent=1 // pred_region
      %426 = vsyncadd [#allocation4], 96
      %s427 = sshll.u32 [#allocation5], 4
      %s428 = int_to_ptr.vmem [resolvable:$true] %s427
      %s429 = sshll.u32 %s5, 4
      %s430 = int_to_ptr.hbm [resolvable:$true] %s429
      %435 = dma.vmem_to_hbm [thread:$0]  %s428, 32, %s430, [#allocation4], 32, 32, 2
    $region29: #{discriminator_forward.1} parent=1 // pred_fallthru
      _
    // Predicated region
    $region30: #{discriminator_forward.1} parent=1 // pred_check
      _
    $region31: #{discriminator_forward.1} parent=1 // pred_check_branch
      %437 = sbr.rel (0) target = $region33
    $region32: #{discriminator_forward.1} parent=1 // pred_region
      %439 = dma.done [#allocation4], 128
    $region33: #{discriminator_forward.1} parent=1 // pred_fallthru
      _
    %440 = vsyncpa [#allocation3], 1
    %441 = vsyncpa [#allocation4], 1

</llo_original>
